<compile_context>
chip_gen: v6e
topology: v6e:2x2x1
jax: 0.10.0
libtpu: 0.0.40
codegen_flags: <defaults>
</compile_context>

<pallas_src>
import functools
import math

import jax
import jax.numpy as jnp
from jax.experimental import pallas as pl
from jax.experimental.pallas import tpu as pltpu


_NEG_LARGE = -1e30  # finite "minus infinity": avoids NaN if a row were ever fully masked


def _head_kernel(x_ref, wqkv_ref, o_ref, *, causal: bool, approx_recip: bool):
    # x_ref:    (Bb, T, C)   activations for Bb batch elements
    # wqkv_ref: (C, 3*Dp)    fused, lane-padded [Wq*scale | Wk | Wv]
    # o_ref:    (Bb, T, Dp)  lane-dense output block (Dp % 128 == 0)
    bb, t, dp = o_ref.shape
    cdtype = x_ref.dtype            # narrow MXU operand dtype (bf16 stays bf16)

    x = x_ref[...]                  # (Bb, T, C), native dtype
    w = wqkv_ref[...]               # (C, 3*Dp)

    # Single fused QKV projection, f32 accumulation on the MXU.
    qkv = jax.lax.dot_general(
        x, w, dimension_numbers=(((2,), (0,)), ((), ())),
        preferred_element_type=jnp.float32)                 # (Bb, T, 3*Dp)

    # Lane-aligned (multiple-of-128) static slices; feed the attention matmuls
    # narrow operands (zero-padded columns do not change any sums).
    q = qkv[:, :, 0 * dp:1 * dp].astype(cdtype)
    k = qkv[:, :, 1 * dp:2 * dp].astype(cdtype)
    v = qkv[:, :, 2 * dp:3 * dp].astype(cdtype)

    # scores = q @ k^T without materializing a transpose: contract last dims,
    # batch over Bb.  1/sqrt(D) is already folded into Wq.
    scores = jax.lax.dot_general(
        q, k, dimension_numbers=(((2,), (2,)), ((0,), (0,))),
        preferred_element_type=jnp.float32)                 # (Bb, T, T) f32

    if causal:
        row = jax.lax.broadcasted_iota(jnp.int32, (t, t), 0)
        col = jax.lax.broadcasted_iota(jnp.int32, (t, t), 1)
        scores = jnp.where((col <= row)[None, :, :], scores, _NEG_LARGE)

    # Numerically-stable softmax along the key axis (f32 math).
    m = jnp.max(scores, axis=-1, keepdims=True)
    e = jnp.exp(scores - m)
    denom = jnp.sum(e, axis=-1, keepdims=True)
    if approx_recip:
        attn = e * pl.reciprocal(denom, approx=True)        # EUP vrcp, ~free
    else:
        attn = e / denom
    attn = attn.astype(cdtype)

    # (Bb, T, T) @ (Bb, T, Dp) -> (Bb, T, Dp), f32 accumulation.
    out = jax.lax.dot_general(
        attn, v, dimension_numbers=(((2,), (1,)), ((0,), (0,))),
        preferred_element_type=jnp.float32)
    o_ref[...] = out.astype(o_ref.dtype)


def _vmem_capacity_bytes():
    """Physical per-core VMEM; conservative (v7x) fallback if the query fails."""
    try:
        return int(pltpu.get_tpu_info().vmem_capacity_bytes)
    except Exception:
        return 64 << 20


def _pick_batch_block(B, T, C, Dp, itemsize, budget_bytes):
    """Largest batch block whose per-step working set fits `budget_bytes`,
    capped at ceil(B/2) so the grid has >= 2 steps (both v7x TCs get work)."""
    f32 = 4
    per_b = (T * C * itemsize                 # x block
             + T * 3 * Dp * f32               # qkv f32 accumulator
             + 3 * T * Dp * itemsize          # q/k/v in compute dtype
             + 2 * T * T * f32                # scores + exp (f32)
             + T * T * itemsize               # attn in compute dtype
             + T * Dp * (f32 + itemsize))     # out accumulator + out block
    cap = max(1, budget_bytes // max(per_b, 1))
    max_bb = max(1, pl.cdiv(B, 2)) if B >= 2 else 1
    return int(min(B, cap, max_bb))


def head_forward(x, wq, wk, wv, mode="encoder", approx_softmax=True,
                 return_padded=False):
    """x: (B, T, C); wq/wk/wv: (C, D) applied as x @ W (== nn.Linear weight.T).

    Returns (B, T, D) matching the PyTorch Head forward in eval mode
    (or the lane-dense (B, T, Dp) slab if return_padded=True)."""
    B, T, C = x.shape
    D = wq.shape[1]
    Dp = 128 * pl.cdiv(D, 128)          # lane-pad head dim -> dense 128-wide stores
    scale = 1.0 / math.sqrt(D)

    def _pad(w):
        return jnp.pad(w, ((0, 0), (0, Dp - D))) if Dp != D else w

    # Fuse + zero-pad projection weights to (C, 3*Dp); fold the softmax scale
    # into Wq (exact weight-side transform, not an activation pre-scale).
    wqkv = jnp.concatenate(
        [_pad(wq.astype(jnp.float32) * scale), _pad(wk), _pad(wv)],
        axis=1).astype(x.dtype)

    itemsize = jnp.dtype(x.dtype).itemsize
    vmem_cap = _vmem_capacity_bytes()
    # Generation-aware per-step working-set budget: bigger on 128 MiB-class
    # chips (v5e/v6e), tighter on v7x's 64 MiB.
    budget = (32 << 20) if vmem_cap >= (100 << 20) else (20 << 20)
    Bb = _pick_batch_block(B, T, C, Dp, itemsize, budget)
    grid = (pl.cdiv(B, Bb),)

    kernel = functools.partial(
        _head_kernel, causal=(mode == "decoder"), approx_recip=approx_softmax)

    # Rough VMEM need per step (double-buffered blocks + intermediates).
    f32 = 4
    x_bytes = Bb * T * C * itemsize
    w_bytes = C * 3 * Dp * itemsize
    o_bytes = Bb * T * Dp * itemsize
    inter_bytes = Bb * (T * 3 * Dp * f32 + 3 * T * Dp * itemsize
                        + 2 * T * T * f32 + T * T * itemsize + T * Dp * f32)
    est = 2 * (x_bytes + w_bytes + o_bytes) + inter_bytes
    cp = dict(dimension_semantics=("parallel",))
    if est > (16 << 20):
        # Raise the scoped VMEM limit only when needed, clamped to the chip's
        # real capacity minus headroom (never above physical VMEM on v7x).
        cp["vmem_limit_bytes"] = int(min(est + (8 << 20), vmem_cap - (12 << 20)))

    out = pl.pallas_call(
        kernel,
        out_shape=jax.ShapeDtypeStruct((B, T, Dp), x.dtype),
        grid_spec=pltpu.PrefetchScalarGridSpec(
            num_scalar_prefetch=0,
            grid=grid,
            in_specs=[
                # Last two block dims equal the full array dims -> (8,128) rule
                # holds for any T, C; partial leading (batch) blocks are fine.
                pl.BlockSpec((Bb, T, C), lambda b: (b, 0, 0)),
                pl.BlockSpec((C, 3 * Dp), lambda b: (0, 0)),
            ],
            out_specs=pl.BlockSpec((Bb, T, Dp), lambda b: (b, 0, 0)),
        ),
        compiler_params=pltpu.CompilerParams(**cp),
    )(x, wqkv)

    if return_padded:
        # Lane-dense slab; a multi-head consumer (concat / Wo) can absorb the
        # zero columns instead of paying a second HBM pass for the slice.
        return out
    return out[..., :D]


def head_reference(x, wq, wk, wv, mode="encoder"):
    """Pure-JAX reference mirroring the PyTorch forward (eval mode)."""
    q = jnp.einsum("btc,cd->btd", x, wq)
    k = jnp.einsum("btc,cd->btd", x, wk)
    v = jnp.einsum("btc,cd->btd", x, wv)
    d_k = q.shape[-1]
    scores = jnp.einsum("btd,bsd->bts", q, k) / (d_k ** 0.5)
    if mode == "decoder":
        t = scores.shape[-1]
        mask = jnp.tril(jnp.ones((t, t), dtype=bool))
        scores = jnp.where(mask, scores, -jnp.inf)
    attn = jax.nn.softmax(scores, axis=-1)
    return jnp.einsum("bts,bsd->btd", attn, v)


if __name__ == "__main__":
    # Small shapes consistent with the module: batch=2, seq=8, embedding=32, attn_dim=8
    B, T, C, D = 2, 8, 32, 8
    key = jax.random.PRNGKey(0)
    kx, kq, kk, kv = jax.random.split(key, 4)

    x = jax.random.normal(kx, (B, T, C), dtype=jnp.float32)
    # nn.Linear default init: uniform(-1/sqrt(in_features), 1/sqrt(in_features))
    bound = 1.0 / math.sqrt(C)
    wq = jax.random.uniform(kq, (C, D), jnp.float32, -bound, bound)
    wk = jax.random.uniform(kk, (C, D), jnp.float32, -bound, bound)
    wv = jax.random.uniform(kv, (C, D), jnp.float32, -bound, bound)

    for mode in ("encoder", "decoder"):
        out = head_forward(x, wq, wk, wv, mode=mode)
        out = jax.block_until_ready(out)
        ref = head_reference(x, wq, wk, wv, mode=mode)
        assert out.shape == (B, T, D)
        # Tolerance loosened slightly for the approx (EUP) reciprocal in softmax.
        assert jnp.allclose(out, ref, atol=1e-2, rtol=1e-2), f"mismatch in mode={mode}"

    print("KERNEL_OK")
</pallas_src>

<mosaic_0001>
module attributes {stable_mosaic.version = 11 : i64} {
  func.func @_head_kernel(%arg0: i32, %arg1: memref<1x8x32xf32, #tpu.memory_space<vmem>>, %arg2: memref<32x384xf32, #tpu.memory_space<vmem>>, %arg3: memref<1x8x128xf32, #tpu.memory_space<vmem>>) attributes {dimension_semantics = [#tpu.dimension_semantics<parallel>], iteration_bounds = array<i64: 2>, scalar_prefetch = 0 : i64, scratch_operands = 0 : i64, tpu.core_type = #tpu.core_type<tc>, window_params = [{transform_indices = @transform_0, window_bounds = array<i64: 1, 8, 32>}, {pipeline_mode = #tpu.pipeline_mode<synchronous>, transform_indices = @transform_1, window_bounds = array<i64: 32, 384>}, {transform_indices = @transform_2, window_bounds = array<i64: 1, 8, 128>}]} {
    %c0 = arith.constant 0 : index
    %c0_0 = arith.constant 0 : index
    %c0_1 = arith.constant 0 : index
    %0 = vector.load %arg1[%c0, %c0_0, %c0_1] : memref<1x8x32xf32, #tpu.memory_space<vmem>>, vector<1x8x32xf32>
    %c0_2 = arith.constant 0 : index
    %c0_3 = arith.constant 0 : index
    %1 = vector.load %arg2[%c0_2, %c0_3] : memref<32x384xf32, #tpu.memory_space<vmem>>, vector<32x384xf32>
    %cst = arith.constant dense<0.000000e+00> : vector<1x8x384xf32>
    %2 = tpu.matmul %0, %1, %cst {dimension_numbers = #tpu.dot_dimension_numbers<[2], [0], [0, 1], [1], [0, 0, 0, 1, 1, 1], [], []>} : vector<1x8x32xf32>, vector<32x384xf32>, vector<1x8x384xf32> -> vector<1x8x384xf32>
    %3 = vector.extract_strided_slice %2 {offsets = [0, 0, 0], sizes = [1, 8, 128], strides = [1, 1, 1]} : vector<1x8x384xf32> to vector<1x8x128xf32>
    %4 = vector.extract_strided_slice %2 {offsets = [0, 0, 128], sizes = [1, 8, 128], strides = [1, 1, 1]} : vector<1x8x384xf32> to vector<1x8x128xf32>
    %5 = vector.extract_strided_slice %2 {offsets = [0, 0, 256], sizes = [1, 8, 128], strides = [1, 1, 1]} : vector<1x8x384xf32> to vector<1x8x128xf32>
    %cst_4 = arith.constant dense<0.000000e+00> : vector<1x8x8xf32>
    %6 = tpu.matmul %3, %4, %cst_4 {dimension_numbers = #tpu.dot_dimension_numbers<[2], [2], [1], [1], [0, 0, 0, 1, 1, 1], [0], [0]>} : vector<1x8x128xf32>, vector<1x8x128xf32>, vector<1x8x8xf32> -> vector<1x8x8xf32>
    %cst_5 = arith.constant dense<0xFF800000> : vector<1x8xf32>
    %7 = vector.multi_reduction <maximumf>, %6, %cst_5 [2] : vector<1x8x8xf32> to vector<1x8xf32>
    %8 = vector.shape_cast %7 : vector<1x8xf32> to vector<1x8x1xf32>
    %9 = vector.broadcast %8 : vector<1x8x1xf32> to vector<1x8x8xf32>
    %10 = arith.subf %6, %9 : vector<1x8x8xf32>
    %11 = math.exp %10 : vector<1x8x8xf32>
    %cst_6 = arith.constant dense<0.000000e+00> : vector<1x8xf32>
    %12 = vector.multi_reduction <add>, %11, %cst_6 [2] : vector<1x8x8xf32> to vector<1x8xf32>
    %13 = vector.shape_cast %12 : vector<1x8xf32> to vector<1x8x1xf32>
    %14 = tpu.reciprocal %13 {approx = true} : vector<1x8x1xf32> -> vector<1x8x1xf32>
    %15 = vector.broadcast %14 : vector<1x8x1xf32> to vector<1x8x8xf32>
    %16 = arith.mulf %11, %15 : vector<1x8x8xf32>
    %cst_7 = arith.constant dense<0.000000e+00> : vector<1x8x128xf32>
    %17 = tpu.matmul %16, %5, %cst_7 {dimension_numbers = #tpu.dot_dimension_numbers<[2], [1], [1], [2], [0, 0, 0, 1, 1, 2], [0], [0]>} : vector<1x8x8xf32>, vector<1x8x128xf32>, vector<1x8x128xf32> -> vector<1x8x128xf32>
    %c0_8 = arith.constant 0 : index
    %c0_9 = arith.constant 0 : index
    %c0_10 = arith.constant 0 : index
    %18 = vector.load %arg3[%c0_8, %c0_9, %c0_10] : memref<1x8x128xf32, #tpu.memory_space<vmem>>, vector<1x8x128xf32>
    tpu.vector_store %arg3[%c0_8, %c0_9, %c0_10], %17 {strides = array<i32>} : memref<1x8x128xf32, #tpu.memory_space<vmem>>, vector<1x8x128xf32>,
    return
  }
  func.func @transform_0(%arg0: i32) -> (i32, i32, i32) {
    %c0_i32 = arith.constant 0 : i32
    %c0_i32_0 = arith.constant 0 : i32
    %c0_i32_1 = arith.constant 0 : i32
    return %arg0, %c0_i32, %c0_i32_0 : i32, i32, i32
  }
  func.func @transform_1(%arg0: i32) -> (i32, i32) {
    %c0_i32 = arith.constant 0 : i32
    %c0_i32_0 = arith.constant 0 : i32
    %c0_i32_1 = arith.constant 0 : i32
    return %c0_i32, %c0_i32_0 : i32, i32
  }
  func.func @transform_2(%arg0: i32) -> (i32, i32, i32) {
    %c0_i32 = arith.constant 0 : i32
    %c0_i32_0 = arith.constant 0 : i32
    %c0_i32_1 = arith.constant 0 : i32
    return %arg0, %c0_i32, %c0_i32_0 : i32, i32, i32
  }
}

</mosaic_0001>

<llo_original>
// kernel: tpu_custom_call.1
$region0: #{tpu_custom_call.1}
  #allocation0 [shape = 'u32[]', space=smem, size = 0x4, offset = 0x4, fixed_abs, tag = 'smem constant byte address 0x4 - core index']
  #allocation1 [shape = 'u32[144,128]{1,0:T(1,128)}', space=vmem, size = 0x12000, scoped, tag = 'internal scratch']
  %s0 = inlined_call_operand.hbm [shape: f32[2,8,32], index: 0, kind: input, shape index: {}]
  %s1 = inlined_call_operand.hbm [shape: f32[32,384], index: 1, kind: input, shape index: {}]
  %s2 = inlined_call_operand.hbm [shape: f32[2,8,128], index: 2, kind: output, shape index: {}]
  %s3 = sld [smem:[#allocation0]]
  $region49: #{tpu_custom_call.1} parent=0
    _
  %s5 = ssub.s32 1, %s3
  %s6 = scalar_select 0, %s5, %s3
  $region1: #{tpu_custom_call.1} parent=0
    #allocation2 [shape = 'u8[8192]{0}', space=vmem, size = 0x2000, scoped, tag = 'input window, operand 0']
    #allocation3 [shape = 's32[2]{0}', space=sflag, size = 0x8, scoped, tag = 'scoped memory for tpu_custom_call.1']
    #allocation4 [shape = 's32[2]{0}', space=sflag, size = 0x8, scoped, tag = 'scoped memory for tpu_custom_call.1']
    #allocation5 [shape = 'u8[49152]{0}', space=vmem, size = 0xc000, scoped, tag = 'input window, operand 1, single buffered']
    #allocation6 [shape = 's32[1]{0}', space=sflag, size = 0x4, scoped, tag = 'scoped memory for tpu_custom_call.1']
    #allocation7 [shape = 'u8[8192]{0}', space=vmem, size = 0x2000, scoped, tag = 'output window, operand 0']
    %7 = vsyncpa [#allocation3], 0
    %s8 = scalar_lea.sflag [#allocation3], 1
    %9 = vsyncpa %s8, 0
    %10 = vsyncpa [#allocation6], 0
    %11 = vsyncpa [#allocation4], 0
    %s12 = scalar_lea.sflag [#allocation4], 1
    %13 = vsyncpa %s12, 0
    loop: start=0, step=1, limit=4
    $region2: #{tpu_custom_call.1} parent=1 // loop_pre_header
      _
    $region3: #{tpu_custom_call.1} parent=1 // loop_header
      %s15 = sphi 0, %s19
      %p16 = scmp.ge.s32.totalorder %s15, 4
      %s25 = sphi 0, %s27
      %s28 = sphi 0, %s25
      %s29 = sphi 0, %s28
      %s45 = sphi 0, %s29
      %s49 = sphi 0, %s49
      %s51 = sphi 0, %s49
      %s52 = sphi 0, %s51
      %s66 = sphi 0, %s52
      %s72 = sphi 0, %s74
      %s75 = sphi 0, %s72
      %s76 = sphi 0, %s75
      %s92 = sphi 0, %s76
    $region4: #{tpu_custom_call.1} parent=1 // loop_header_branch
      %18 = sbr.rel (%p16) target = $region8
    $region5: #{tpu_custom_call.1} parent=1 // loop_body
      %s20 = ssub.s32 %s15, 1
      %s21 = ssub.s32 %s15, 2
      %s22 = sadd.s32 %s15, 1
      %s23 = ssub.s32 %s15, %s22
      %p24 = scmp.eq.s32.totalorder %s23, 0
      %s26 = sadd.s32 %s25, 1
      %s27 = scalar_select %p24, %s25, %s26
      %p30 = pneg %p24
      %p31 = scmp.eq.s32.totalorder %s15, 1
      %p32 = por %p30, %p31
      %p33 = scmp.ne.s32.totalorder %s25, %s28
      %p34 = scmp.eq.s32.totalorder %s15, 0
      %p35 = por %p33, %p34
      %p36 = scmp.ne.s32.totalorder %s25, %s28
      %p37 = scmp.eq.s32.totalorder %s20, 1
      %p38 = por %p36, %p37
      %p39 = scmp.ne.s32.totalorder %s28, %s29
      %p40 = scmp.eq.s32.totalorder %s20, 0
      %p41 = por %p39, %p40
      %p42 = scmp.ne.s32.totalorder %s28, %s29
      %p43 = scmp.eq.s32.totalorder %s21, 1
      %p44 = por %p42, %p43
      %p46 = scmp.ne.s32.totalorder %s29, %s45
      %p47 = scmp.eq.s32.totalorder %s21, 0
      %p48 = por %p46, %p47
      %s50 = sadd.s32 %s49, 1
      %p53 = scmp.eq.s32.totalorder %s15, 1
      %p54 = scmp.ne.s32.totalorder %s49, %s51
      %p55 = scmp.eq.s32.totalorder %s15, 0
      %p56 = por %p54, %p55
      %p57 = scmp.ne.s32.totalorder %s49, %s51
      %p58 = scmp.eq.s32.totalorder %s20, 1
      %p59 = por %p57, %p58
      %p60 = scmp.ne.s32.totalorder %s51, %s52
      %p61 = scmp.eq.s32.totalorder %s20, 0
      %p62 = por %p60, %p61
      %p63 = scmp.ne.s32.totalorder %s51, %s52
      %p64 = scmp.eq.s32.totalorder %s21, 1
      %p65 = por %p63, %p64
      %p67 = scmp.ne.s32.totalorder %s52, %s66
      %p68 = scmp.eq.s32.totalorder %s21, 0
      %p69 = por %p67, %p68
      %s70 = ssub.s32 %s15, %s22
      %p71 = scmp.eq.s32.totalorder %s70, 0
      %s73 = sadd.s32 %s72, 1
      %s74 = scalar_select %p71, %s72, %s73
      %p77 = pneg %p71
      %p78 = scmp.eq.s32.totalorder %s15, 1
      %p79 = por %p77, %p78
      %p80 = scmp.ne.s32.totalorder %s72, %s75
      %p81 = scmp.eq.s32.totalorder %s15, 0
      %p82 = por %p80, %p81
      %p83 = scmp.ne.s32.totalorder %s72, %s75
      %p84 = scmp.eq.s32.totalorder %s20, 1
      %p85 = por %p83, %p84
      %p86 = scmp.ne.s32.totalorder %s75, %s76
      %p87 = scmp.eq.s32.totalorder %s20, 0
      %p88 = por %p86, %p87
      %p89 = scmp.ne.s32.totalorder %s75, %s76
      %p90 = scmp.eq.s32.totalorder %s21, 1
      %p91 = por %p89, %p90
      %p93 = scmp.ne.s32.totalorder %s76, %s92
      %p94 = scmp.eq.s32.totalorder %s21, 0
      %p95 = por %p93, %p94
      %p96 = scmp.le.s32.totalorder 1, %s15
      %p97 = scmp.lt.s32.totalorder %s15, 3
      %p98 = pnand %p96, %p97
      %p99 = pneg %p98
      // Predicated region
      $region9: #{tpu_custom_call.1} parent=5 // pred_check
        _
      $region10: #{tpu_custom_call.1} parent=5 // pred_check_branch
        %101 = sbr.rel (%p98) target = $region12
      $region11: #{tpu_custom_call.1} parent=5 // pred_region
        %s102 = ssub.s32 %s15, 1
        // Predicated region
        $region13: #{tpu_custom_call.1} parent=11 // pred_check
          %p103 = pneg %p62
        $region14: #{tpu_custom_call.1} parent=11 // pred_check_branch
          %105 = sbr.rel (%p103) target = $region16
        $region15: #{tpu_custom_call.1} parent=11 // pred_region
          %s107 = ssub.s32 1536, 1536
          %108 = vsyncadd [#allocation6], %s107
          %s109 = sshll.u32 [#allocation5], 4
          %s110 = int_to_ptr.vmem [resolvable:$true] %s109
          %115 = dma.hbm_to_vmem [thread:$0]  %s1, 1536, %s110, [#allocation6], 384, 384, 24
        $region16: #{tpu_custom_call.1} parent=11 // pred_fallthru
          _
      $region12: #{tpu_custom_call.1} parent=5 // pred_fallthru
        _
      %p116 = scmp.lt.s32.totalorder %s15, 2
      // Predicated region
      $region17: #{tpu_custom_call.1} parent=5 // pred_check
        %p117 = pneg %p116
      $region18: #{tpu_custom_call.1} parent=5 // pred_check_branch
        %119 = sbr.rel (%p117) target = $region20
      $region19: #{tpu_custom_call.1} parent=5 // pred_region
        // Predicated region
        $region21: #{tpu_custom_call.1} parent=19 // pred_check
          %p120 = pneg %p35
        $region22: #{tpu_custom_call.1} parent=19 // pred_check_branch
          %122 = sbr.rel (%p120) target = $region24
        $region23: #{tpu_custom_call.1} parent=19 // pred_region
          %s123 = sand.u32 %s25, 1
          %s124 = scalar_lea.sflag [#allocation3], %s123
          %s125 = sand.u32 %s25, 1
          %s126 = smul.addr %s125, 8
          %s127 = scalar_lea.vmem [#allocation2], %s126
          %s129 = ssub.s32 128, 128
          %130 = vsyncadd %s124, %s129
          %s131 = smul.addr %s15, 128
          %s132 = scalar_lea.hbm %s0, %s131
          %s134 = sshll.u32 %s127, 4
          %s135 = int_to_ptr.vmem [resolvable:$true] %s134
          %137 = dma.hbm_to_vmem [thread:$0]  %s132, 128, %s135, %s124
        $region24: #{tpu_custom_call.1} parent=19 // pred_fallthru
          _
      $region20: #{tpu_custom_call.1} parent=5 // pred_fallthru
        _
      %p138 = scmp.le.s32.totalorder 1, %s15
      %p139 = scmp.lt.s32.totalorder %s15, 3
      %p140 = pnand %p138, %p139
      %p141 = pneg %p140
      // Predicated region
      $region25: #{tpu_custom_call.1} parent=5 // pred_check
        _
      $region26: #{tpu_custom_call.1} parent=5 // pred_check_branch
        %143 = sbr.rel (%p140) target = $region28
      $region27: #{tpu_custom_call.1} parent=5 // pred_region
        %s144 = ssub.s32 %s15, 1
        %s145 = sand.u32 %s28, 1
        %s146 = scalar_lea.sflag [#allocation3], %s145
        %s147 = sand.u32 %s28, 1
        %s148 = smul.addr %s147, 8
        %s149 = scalar_lea.vmem [#allocation2], %s148
        // Predicated region
        $region29: #{tpu_custom_call.1} parent=27 // pred_check
          %p150 = pneg %p41
        $region30: #{tpu_custom_call.1} parent=27 // pred_check_branch
          %152 = sbr.rel (%p150) target = $region32
        $region31: #{tpu_custom_call.1} parent=27 // pred_region
          %153 = dma.done %s146, 128
        $region32: #{tpu_custom_call.1} parent=27 // pred_fallthru
          _
        // Predicated region
        $region33: #{tpu_custom_call.1} parent=27 // pred_check
          %p154 = pneg %p62
        $region34: #{tpu_custom_call.1} parent=27 // pred_check_branch
          %156 = sbr.rel (%p154) target = $region36
        $region35: #{tpu_custom_call.1} parent=27 // pred_region
          %157 = dma.done [#allocation6], 1536
        $region36: #{tpu_custom_call.1} parent=27 // pred_fallthru
          _
        %s158 = sand.u32 %s28, 1
        %s159 = scalar_lea.sflag [#allocation3], %s158
        %s160 = sand.u32 %s28, 1
        %s161 = smul.addr %s160, 8
        %s162 = scalar_lea.vmem [#allocation2], %s161
        %p163 = pneg %p41
        %p164 = pneg %p38
        %p165 = pneg %p62
        %p166 = pneg %p59
        %p167 = pneg %p88
        %p168 = pneg %p85
        %s169 = sand.u32 %s75, 1
        %s170 = scalar_lea.sflag [#allocation4], %s169
        %s171 = sand.u32 %s75, 1
        %s172 = smul.addr %s171, 8
        %s173 = scalar_lea.vmem [#allocation7], %s172
        %v174 = vld [vmem:[%s149] sm:$0xff]
        %v175 = vld [vmem:[#allocation5] sm:$0xff]
        %v176 = vld [vmem:[#allocation5 + $0x8] sm:$0xff]
        %v177 = vld [vmem:[#allocation5 + $0x10] sm:$0xff]
        %v178 = vld [vmem:[#allocation5 + $0x18] sm:$0xff]
        %v179 = vld [vmem:[#allocation5 + $0x20] sm:$0xff]
        %v180 = vld [vmem:[#allocation5 + $0x28] sm:$0xff]
        %v181 = vld [vmem:[#allocation5 + $0x30] sm:$0xff]
        %v182 = vld [vmem:[#allocation5 + $0x38] sm:$0xff]
        %v183 = vld [vmem:[#allocation5 + $0x40] sm:$0xff]
        %v184 = vld [vmem:[#allocation5 + $0x48] sm:$0xff]
        %v185 = vld [vmem:[#allocation5 + $0x50] sm:$0xff]
        %v186 = vld [vmem:[#allocation5 + $0x58] sm:$0xff]
        %vm187 = vcmask 261120
        %v189 = vsel %vm187, %v174, 0
        %191 = vmatprep.subr.mxu0 0.0
        %192 = vmatpush1.msra.mxu0 0.0
        %193 = vmatprep.subr.mxu0 0.0
        %194 = vmatpush1.msra.mxu0 0.0
        %195 = vmatprep.subr.mxu0 0.0
        %196 = vmatpush1.msra.mxu0 0.0
        %197 = vmatprep.subr.mxu0 0.0
        %198 = vmatpush1.msra.mxu0 0.0
        %199 = vmatprep.subr.mxu0 0.0
        %200 = vmatpush1.msra.mxu0 0.0
        %201 = vmatprep.subr.mxu0 0.0
        %202 = vmatpush1.msra.mxu0 0.0
        %203 = vmatprep.subr.mxu0 0.0
        %204 = vmatpush1.msra.mxu0 0.0
        %205 = vmatprep.subr.mxu0 0.0
        %206 = vmatpush1.msra.mxu0 0.0
        %207 = vmatprep.subr.mxu0 0.0
        %208 = vmatpush1.msra.mxu0 0.0
        %209 = vmatprep.subr.mxu0 0.0
        %210 = vmatpush1.msra.mxu0 0.0
        %211 = vmatprep.subr.mxu0 0.0
        %212 = vmatpush1.msra.mxu0 0.0
        %213 = vmatprep.subr.mxu0 0.0
        %214 = vmatpush1.msra.mxu0 0.0
        %215 = vmatprep.subr.mxu0 %v185
        %216 = vmatpush1.msra.mxu0 %v184
        %217 = vmatprep.subr.mxu0 %v182
        %218 = vmatpush1.msra.mxu0 %v181
        %219 = vmatprep.subr.mxu0 %v179
        %220 = vmatpush1.msra.mxu0 %v178
        %221 = vmatprep.subr.mxu0 %v176
        %222 = vmatpush1.msra.mxu0 %v175
        %223 = vmatprep.subr.mxu0 0.0
        %224 = vmatpush2.msra.mxu0 0.0
        %225 = vmatprep.subr.mxu0 0.0
        %226 = vmatpush2.msra.mxu0 0.0
        %227 = vmatprep.subr.mxu0 0.0
        %228 = vmatpush2.msra.mxu0 0.0
        %229 = vmatprep.subr.mxu0 0.0
        %230 = vmatpush2.msra.mxu0 0.0
        %231 = vmatprep.subr.mxu0 0.0
        %232 = vmatpush2.msra.mxu0 0.0
        %233 = vmatprep.subr.mxu0 0.0
        %234 = vmatpush2.msra.mxu0 0.0
        %235 = vmatprep.subr.mxu0 0.0
        %236 = vmatpush2.msra.mxu0 0.0
        %237 = vmatprep.subr.mxu0 0.0
        %238 = vmatpush2.msra.mxu0 0.0
        %239 = vmatprep.subr.mxu0 0.0
        %240 = vmatpush2.msra.mxu0 0.0
        %241 = vmatprep.subr.mxu0 0.0
        %242 = vmatpush2.msra.mxu0 0.0
        %243 = vmatprep.subr.mxu0 0.0
        %244 = vmatpush2.msra.mxu0 0.0
        %245 = vmatprep.subr.mxu0 0.0
        %246 = vmatpush2.msra.mxu0 0.0
        %247 = vmatprep.subr.mxu0 0.0
        %248 = vmatpush2.msra.mxu0 0.0
        %249 = vmatprep.subr.mxu0 0.0
        %250 = vmatpush2.msra.mxu0 0.0
        %251 = vmatprep.subr.mxu0 0.0
        %252 = vmatpush2.msra.mxu0 0.0
        %253 = vmatprep.subr.mxu0 0.0
        %254 = vmatpush2.msra.mxu0 0.0
        %255 = vmatprep.mubr.f32.mxu0 0.0
        %256 = vmatmul.mubr.f32.gmra.mxu0 %v189
        %v257 = vpop.f32.mrf.mxu0
        %v258 = vadd.f32 0.0, %v257
        %v259 = vpop.f32.mrf.mxu0
        %v260 = vadd.f32 0.0, %v259
        %261 = vdwg.mxu0
        %262 = vmatprep.subr.mxu0 0.0
        %263 = vmatpush1.msra.mxu0 0.0
        %264 = vmatprep.subr.mxu0 0.0
        %265 = vmatpush1.msra.mxu0 0.0
        %266 = vmatprep.subr.mxu0 0.0
        %267 = vmatpush1.msra.mxu0 0.0
        %268 = vmatprep.subr.mxu0 0.0
        %269 = vmatpush1.msra.mxu0 0.0
        %270 = vmatprep.subr.mxu0 0.0
        %271 = vmatpush1.msra.mxu0 0.0
        %272 = vmatprep.subr.mxu0 0.0
        %273 = vmatpush1.msra.mxu0 0.0
        %274 = vmatprep.subr.mxu0 0.0
        %275 = vmatpush1.msra.mxu0 0.0
        %276 = vmatprep.subr.mxu0 0.0
        %277 = vmatpush1.msra.mxu0 0.0
        %278 = vmatprep.subr.mxu0 0.0
        %279 = vmatpush1.msra.mxu0 0.0
        %280 = vmatprep.subr.mxu0 0.0
        %281 = vmatpush1.msra.mxu0 0.0
        %282 = vmatprep.subr.mxu0 0.0
        %283 = vmatpush1.msra.mxu0 0.0
        %284 = vmatprep.subr.mxu0 0.0
        %285 = vmatpush1.msra.mxu0 0.0
        %286 = vmatprep.subr.mxu0 0.0
        %287 = vmatpush1.msra.mxu0 %v186
        %288 = vmatprep.subr.mxu0 0.0
        %289 = vmatpush1.msra.mxu0 %v183
        %290 = vmatprep.subr.mxu0 0.0
        %291 = vmatpush1.msra.mxu0 %v180
        %292 = vmatprep.subr.mxu0 0.0
        %293 = vmatpush1.msra.mxu0 %v177
        %294 = vmatprep.subr.mxu0 0.0
        %295 = vmatpush2.msra.mxu0 0.0
        %296 = vmatprep.subr.mxu0 0.0
        %297 = vmatpush2.msra.mxu0 0.0
        %298 = vmatprep.subr.mxu0 0.0
        %299 = vmatpush2.msra.mxu0 0.0
        %300 = vmatprep.subr.mxu0 0.0
        %301 = vmatpush2.msra.mxu0 0.0
        %302 = vmatprep.subr.mxu0 0.0
        %303 = vmatpush2.msra.mxu0 0.0
        %304 = vmatprep.subr.mxu0 0.0
        %305 = vmatpush2.msra.mxu0 0.0
        %306 = vmatprep.subr.mxu0 0.0
        %307 = vmatpush2.msra.mxu0 0.0
        %308 = vmatprep.subr.mxu0 0.0
        %309 = vmatpush2.msra.mxu0 0.0
        %310 = vmatprep.subr.mxu0 0.0
        %311 = vmatpush2.msra.mxu0 0.0
        %312 = vmatprep.subr.mxu0 0.0
        %313 = vmatpush2.msra.mxu0 0.0
        %314 = vmatprep.subr.mxu0 0.0
        %315 = vmatpush2.msra.mxu0 0.0
        %316 = vmatprep.subr.mxu0 0.0
        %317 = vmatpush2.msra.mxu0 0.0
        %318 = vmatprep.subr.mxu0 0.0
        %319 = vmatpush2.msra.mxu0 0.0
        %320 = vmatprep.subr.mxu0 0.0
        %321 = vmatpush2.msra.mxu0 0.0
        %322 = vmatprep.subr.mxu0 0.0
        %323 = vmatpush2.msra.mxu0 0.0
        %324 = vmatprep.subr.mxu0 0.0
        %325 = vmatpush2.msra.mxu0 0.0
        %326 = vmatprep.mubr.f32.mxu0 0.0
        %327 = vmatmul.mubr.f32.gmra.mxu0 %v189
        %v328 = vpop.f32.mrf.mxu0
        %v329 = vadd.f32 0.0, %v328
        %v330 = vpop.f32.mrf.mxu0
        %331 = vdwg.mxu0
        %332 = vmatprep.subr.mxu0 0.0
        %333 = vmatpush1.xpose.msra.mxu0 0.0
        %334 = vmatprep.subr.mxu0 0.0
        %335 = vmatpush1.xpose.msra.mxu0 0.0
        %336 = vmatprep.subr.mxu0 0.0
        %337 = vmatpush1.xpose.msra.mxu0 0.0
        %338 = vmatprep.subr.mxu0 0.0
        %339 = vmatpush1.xpose.msra.mxu0 0.0
        %340 = vmatprep.subr.mxu0 0.0
        %341 = vmatpush1.xpose.msra.mxu0 0.0
        %342 = vmatprep.subr.mxu0 0.0
        %343 = vmatpush1.xpose.msra.mxu0 0.0
        %344 = vmatprep.subr.mxu0 0.0
        %345 = vmatpush1.xpose.msra.mxu0 0.0
        %346 = vmatprep.subr.mxu0 0.0
        %347 = vmatpush1.xpose.msra.mxu0 0.0
        %348 = vmatprep.subr.mxu0 0.0
        %349 = vmatpush1.xpose.msra.mxu0 0.0
        %350 = vmatprep.subr.mxu0 0.0
        %351 = vmatpush1.xpose.msra.mxu0 0.0
        %352 = vmatprep.subr.mxu0 0.0
        %353 = vmatpush1.xpose.msra.mxu0 0.0
        %354 = vmatprep.subr.mxu0 0.0
        %355 = vmatpush1.xpose.msra.mxu0 0.0
        %356 = vmatprep.subr.mxu0 0.0
        %357 = vmatpush1.xpose.msra.mxu0 0.0
        %358 = vmatprep.subr.mxu0 0.0
        %359 = vmatpush1.xpose.msra.mxu0 0.0
        %360 = vmatprep.subr.mxu0 0.0
        %361 = vmatpush1.xpose.msra.mxu0 0.0
        %362 = vmatprep.subr.mxu0 0.0
        %363 = vmatpush1.xpose.msra.mxu0 %v260
        %364 = vmatprep.subr.mxu0 0.0
        %365 = vmatpush2.xpose.msra.mxu0 0.0
        %366 = vmatprep.subr.mxu0 0.0
        %367 = vmatpush2.xpose.msra.mxu0 0.0
        %368 = vmatprep.subr.mxu0 0.0
        %369 = vmatpush2.xpose.msra.mxu0 0.0
        %370 = vmatprep.subr.mxu0 0.0
        %371 = vmatpush2.xpose.msra.mxu0 0.0
        %372 = vmatprep.subr.mxu0 0.0
        %373 = vmatpush2.xpose.msra.mxu0 0.0
        %374 = vmatprep.subr.mxu0 0.0
        %375 = vmatpush2.xpose.msra.mxu0 0.0
        %376 = vmatprep.subr.mxu0 0.0
        %377 = vmatpush2.xpose.msra.mxu0 0.0
        %378 = vmatprep.subr.mxu0 0.0
        %379 = vmatpush2.xpose.msra.mxu0 0.0
        %380 = vmatprep.subr.mxu0 0.0
        %381 = vmatpush2.xpose.msra.mxu0 0.0
        %382 = vmatprep.subr.mxu0 0.0
        %383 = vmatpush2.xpose.msra.mxu0 0.0
        %384 = vmatprep.subr.mxu0 0.0
        %385 = vmatpush2.xpose.msra.mxu0 0.0
        %386 = vmatprep.subr.mxu0 0.0
        %387 = vmatpush2.xpose.msra.mxu0 0.0
        %388 = vmatprep.subr.mxu0 0.0
        %389 = vmatpush2.xpose.msra.mxu0 0.0
        %390 = vmatprep.subr.mxu0 0.0
        %391 = vmatpush2.xpose.msra.mxu0 0.0
        %392 = vmatprep.subr.mxu0 0.0
        %393 = vmatpush2.xpose.msra.mxu0 0.0
        %394 = vmatprep.subr.mxu0 0.0
        %395 = vmatpush2.xpose.msra.mxu0 0.0
        %396 = vmatprep.mubr.f32.mxu0 0.0
        %397 = vmatmul.mubr.f32.gmra.mxu0 %v258
        %v398 = vpop.f32.mrf.mxu0
        %v399 = vadd.f32 0.0, %v398
        %v400 = vpop.f32.mrf.mxu0
        %401 = vdwg.mxu0
        %vm402 = vcmask 64512
        %v403 = vsel %vm402, %v399, -inf
        %404 = vmax.xlane.f32.xlu0 %v403
        %v405 = vpop.xlane.xlu0 %404
        %v406 = vsub.f32 %v399, %v405
        %v407 = vmul.f32 %v406, 1.442695
        %v408 = vpow.pop %v407
        %v409 = vsel %vm402, %v408, 0.0
        %410 = vadd.xlane.f32.xlu0 %v409
        %v411 = vpop.xlane.xlu0 %410
        %v412 = vrcp.pop %v411
        %v413 = vmul.f32 %v408, %v412
        %v415 = vsel %vm402, %v413, 0
        %417 = vmatprep.subr.mxu0 0.0
        %418 = vmatpush1.msra.mxu0 0.0
        %419 = vmatprep.subr.mxu0 0.0
        %420 = vmatpush1.msra.mxu0 0.0
        %421 = vmatprep.subr.mxu0 0.0
        %422 = vmatpush1.msra.mxu0 0.0
        %423 = vmatprep.subr.mxu0 0.0
        %424 = vmatpush1.msra.mxu0 0.0
        %425 = vmatprep.subr.mxu0 0.0
        %426 = vmatpush1.msra.mxu0 0.0
        %427 = vmatprep.subr.mxu0 0.0
        %428 = vmatpush1.msra.mxu0 0.0
        %429 = vmatprep.subr.mxu0 0.0
        %430 = vmatpush1.msra.mxu0 0.0
        %431 = vmatprep.subr.mxu0 0.0
        %432 = vmatpush1.msra.mxu0 0.0
        %433 = vmatprep.subr.mxu0 0.0
        %434 = vmatpush1.msra.mxu0 0.0
        %435 = vmatprep.subr.mxu0 0.0
        %436 = vmatpush1.msra.mxu0 0.0
        %437 = vmatprep.subr.mxu0 0.0
        %438 = vmatpush1.msra.mxu0 0.0
        %439 = vmatprep.subr.mxu0 0.0
        %440 = vmatpush1.msra.mxu0 0.0
        %441 = vmatprep.subr.mxu0 0.0
        %442 = vmatpush1.msra.mxu0 0.0
        %443 = vmatprep.subr.mxu0 0.0
        %444 = vmatpush1.msra.mxu0 0.0
        %445 = vmatprep.subr.mxu0 0.0
        %446 = vmatpush1.msra.mxu0 0.0
        %447 = vmatprep.subr.mxu0 0.0
        %448 = vmatpush1.msra.mxu0 %v329
        %449 = vmatprep.subr.mxu0 0.0
        %450 = vmatpush2.msra.mxu0 0.0
        %451 = vmatprep.subr.mxu0 0.0
        %452 = vmatpush2.msra.mxu0 0.0
        %453 = vmatprep.subr.mxu0 0.0
        %454 = vmatpush2.msra.mxu0 0.0
        %455 = vmatprep.subr.mxu0 0.0
        %456 = vmatpush2.msra.mxu0 0.0
        %457 = vmatprep.subr.mxu0 0.0
        %458 = vmatpush2.msra.mxu0 0.0
        %459 = vmatprep.subr.mxu0 0.0
        %460 = vmatpush2.msra.mxu0 0.0
        %461 = vmatprep.subr.mxu0 0.0
        %462 = vmatpush2.msra.mxu0 0.0
        %463 = vmatprep.subr.mxu0 0.0
        %464 = vmatpush2.msra.mxu0 0.0
        %465 = vmatprep.subr.mxu0 0.0
        %466 = vmatpush2.msra.mxu0 0.0
        %467 = vmatprep.subr.mxu0 0.0
        %468 = vmatpush2.msra.mxu0 0.0
        %469 = vmatprep.subr.mxu0 0.0
        %470 = vmatpush2.msra.mxu0 0.0
        %471 = vmatprep.subr.mxu0 0.0
        %472 = vmatpush2.msra.mxu0 0.0
        %473 = vmatprep.subr.mxu0 0.0
        %474 = vmatpush2.msra.mxu0 0.0
        %475 = vmatprep.subr.mxu0 0.0
        %476 = vmatpush2.msra.mxu0 0.0
        %477 = vmatprep.subr.mxu0 0.0
        %478 = vmatpush2.msra.mxu0 0.0
        %479 = vmatprep.subr.mxu0 0.0
        %480 = vmatpush2.msra.mxu0 0.0
        %481 = vmatprep.mubr.f32.mxu0 0.0
        %482 = vmatmul.mubr.f32.gmra.mxu0 %v415
        %v483 = vpop.f32.mrf.mxu0
        %v484 = vadd.f32 0.0, %v483
        %v485 = vpop.f32.mrf.mxu0
        %486 = vdwg.mxu0
        %487 = vst [vmem:[%s173] sm:$0xff] %v484
        %s488 = sand.u32 %s75, 1
        %s489 = scalar_lea.sflag [#allocation4], %s488
        %s490 = sand.u32 %s75, 1
        %s491 = smul.addr %s490, 8
        %s492 = scalar_lea.vmem [#allocation7], %s491
        // Predicated region
        $region37: #{tpu_custom_call.1} parent=27 // pred_check
          %p493 = pneg %p85
        $region38: #{tpu_custom_call.1} parent=27 // pred_check_branch
          %495 = sbr.rel (%p493) target = $region40
        $region39: #{tpu_custom_call.1} parent=27 // pred_region
          %s497 = ssub.s32 128, 128
          %498 = vsyncadd %s489, %s497
          %s499 = smul.addr %s20, 128
          %s500 = scalar_lea.hbm %s2, %s499
          %s502 = sshll.u32 %s492, 4
          %s503 = int_to_ptr.vmem [resolvable:$true] %s502
          %505 = dma.vmem_to_hbm [thread:$0]  %s503, 128, %s500, %s489
        $region40: #{tpu_custom_call.1} parent=27 // pred_fallthru
          _
      $region28: #{tpu_custom_call.1} parent=5 // pred_fallthru
        _
      %p506 = scmp.le.s32.totalorder 2, %s15
      // Predicated region
      $region41: #{tpu_custom_call.1} parent=5 // pred_check
        %p507 = pneg %p506
      $region42: #{tpu_custom_call.1} parent=5 // pred_check_branch
        %509 = sbr.rel (%p507) target = $region44
      $region43: #{tpu_custom_call.1} parent=5 // pred_region
        %s510 = ssub.s32 %s15, 2
        // Predicated region
        $region45: #{tpu_custom_call.1} parent=43 // pred_check
          %p511 = pneg %p91
        $region46: #{tpu_custom_call.1} parent=43 // pred_check_branch
          %513 = sbr.rel (%p511) target = $region48
        $region47: #{tpu_custom_call.1} parent=43 // pred_region
          %s514 = sand.u32 %s76, 1
          %s515 = scalar_lea.sflag [#allocation4], %s514
          %s516 = sand.u32 %s76, 1
          %s517 = smul.addr %s516, 8
          %s518 = scalar_lea.vmem [#allocation7], %s517
          %519 = dma.done %s515, 128
        $region48: #{tpu_custom_call.1} parent=43 // pred_fallthru
          _
      $region44: #{tpu_custom_call.1} parent=5 // pred_fallthru
        _
    $region6: #{tpu_custom_call.1} parent=1 // loop_footer
      %s19 = sadd.s32 1, %s15
    $region7: #{tpu_custom_call.1} parent=1 // loop_footer_branch
      %14 = sbr.rel target = $region3
    $region8: #{tpu_custom_call.1} parent=1 // loop_exit
      _
    %520 = vsyncpa [#allocation3], 1
    %s521 = scalar_lea.sflag [#allocation3], 1
    %522 = vsyncpa %s521, 1
    %523 = vsyncpa [#allocation6], 1
    %524 = vsyncpa [#allocation4], 1
    %s525 = scalar_lea.sflag [#allocation4], 1
    %526 = vsyncpa %s525, 1

</llo_original>
